<compile_context>
chip_gen: v7x
topology: tpu7x:2x2x1
jax: 0.10.0
libtpu: 0.0.40
codegen_flags: <defaults>
</compile_context>

<pallas_src>
import functools

import jax
import jax.numpy as jnp
from jax import lax
from jax.experimental import pallas as pl
from jax.experimental.pallas import tpu as pltpu

NEG_SLOPE = 0.1  # LeakyReLU slope used by UnaryBlock


def _leaky(x):
    return jnp.where(x > 0, x, NEG_SLOPE * x)


def _round_up(x, m):
    return (x + m - 1) // m * m


def _choose_tile_n(n, desired, mult=16):
    """Largest multiple of `mult` that divides `n` and is <= desired (or None)."""
    t = (min(desired, n) // mult) * mult
    while t >= mult:
        if n % t == 0:
            return t
        t -= mult
    return None


def _upsampling_kernel(idx_ref, sup_ref, q_ref, w3_ref, b3_ref, out_ref, *, m_chunk):
    # idx_ref: (TN, 1) int32     sup_ref: (M_pad, C) bf16 (unary MLP already applied)
    # q_ref:   (TN, C) f32       w3_ref: (C, C) f32       b3_ref: (1, C) f32
    tn, _ = q_ref.shape
    m_pad = sup_ref.shape[0]
    n_chunks = m_pad // m_chunk          # static (m_pad is padded to a multiple of m_chunk)

    idx = idx_ref[...]                   # (TN, 1) int32

    def gather_chunk(start):             # `start` is a static Python int
        # One-hot row-selection matmul on the MXU; exact for 0/1 weights.
        cols = lax.broadcasted_iota(jnp.int32, (tn, m_chunk), 1) + start
        onehot = (cols == idx).astype(sup_ref.dtype)          # (TN, m_chunk) bf16
        chunk = sup_ref[pl.ds(start, m_chunk), :]              # (m_chunk, C) bf16
        return jnp.dot(onehot, chunk, preferred_element_type=jnp.float32)

    # Chunked along M so the iota/one-hot intermediates stay bounded in VMEM.
    latent = gather_chunk(0)
    for ci in range(1, n_chunks):
        latent = latent + gather_chunk(ci * m_chunk)           # (TN, C) f32

    # Residual add with query and the output UnaryBlock, in f32.
    h = latent + q_ref[...].astype(jnp.float32)
    o = _leaky(jnp.dot(h, w3_ref[...], preferred_element_type=jnp.float32) + b3_ref[...])
    out_ref[...] = o.astype(out_ref.dtype)


@functools.partial(jax.jit, static_argnames=("tile_n", "m_chunk", "out_dtype"))
def upsampling_forward(query, support, upsample_indices, params, *,
                       tile_n=2048, m_chunk=512, out_dtype=None):
    """query: (B, N, C_out), support: (B, M, C_in), upsample_indices: (B, N, 1)."""
    B, N, c_out = query.shape
    _, M, _ = support.shape
    w1, b1, w2, b2, w3, b3 = params
    # out_dtype=jnp.bfloat16 halves the largest per-tile HBM stream if the
    # downstream consumer accepts it; default preserves the module's dtype.
    out_dtype = query.dtype if out_dtype is None else out_dtype

    # ---- hoisted unary MLP: run both UnaryBlocks once over the M support rows ----
    f32 = jnp.float32
    h = _leaky(support.astype(f32) @ w1.astype(f32) + b1.astype(f32))
    h = _leaky(h @ w2.astype(f32) + b2.astype(f32))
    sup_act = h.astype(jnp.bfloat16)                  # (B, M, C_out)

    # Pad M up to a multiple of the gather chunk (zero rows are never indexed).
    mc = min(_round_up(m_chunk, 16), _round_up(M, 16))
    m_pad = _round_up(M, mc)
    if m_pad != M:
        sup_act = jnp.pad(sup_act, ((0, 0), (0, m_pad - M), (0, 0)))

    idx = upsample_indices.astype(jnp.int32).reshape(B, N, 1)
    q = query
    # Prefer a point tile that divides N (avoids a padding pass over query);
    # fall back to padding only when N has no suitable divisor.
    tn = _choose_tile_n(N, tile_n)
    if tn is None:
        tn = min(_round_up(min(tile_n, N), 16), _round_up(N, 16))
        n_pad = _round_up(N, tn)
        q = jnp.pad(q, ((0, 0), (0, n_pad - N), (0, 0)))
        idx = jnp.pad(idx, ((0, 0), (0, n_pad - N), (0, 0)))
    else:
        n_pad = N
    n_tiles = n_pad // tn

    w3f = w3.astype(f32)
    b3f = b3.astype(f32).reshape(1, c_out)

    sq = pl.Squeezed()
    grid_spec = pltpu.PrefetchScalarGridSpec(
        num_scalar_prefetch=0,
        grid=(B, n_tiles),
        in_specs=[
            pl.BlockSpec((sq, tn, 1), lambda b, n: (b, n, 0)),           # indices
            pl.BlockSpec((sq, m_pad, c_out), lambda b, n: (b, 0, 0)),    # sup_act (per batch)
            pl.BlockSpec((sq, tn, c_out), lambda b, n: (b, n, 0)),       # query (native dtype)
            pl.BlockSpec((c_out, c_out), lambda b, n: (0, 0)),           # w3 (resident)
            pl.BlockSpec((1, c_out), lambda b, n: (0, 0)),               # b3 (resident)
        ],
        out_specs=pl.BlockSpec((sq, tn, c_out), lambda b, n: (b, n, 0)),
    )

    out = pl.pallas_call(
        functools.partial(_upsampling_kernel, m_chunk=mc),
        out_shape=jax.ShapeDtypeStruct((B, n_pad, c_out), out_dtype),
        grid_spec=grid_spec,
        compiler_params=pltpu.CompilerParams(
            dimension_semantics=("parallel", "parallel"),   # megacore split on v7x
            vmem_limit_bytes=32 * 1024 * 1024,              # portable to v7x (64 MiB physical)
        ),
    )(idx, sup_act, q, w3f, b3f)

    return out if n_pad == N else out[:, :N, :]


def _reference(query, support, upsample_indices, params):
    """Pure-JAX f32 reference of the PyTorch forward."""
    w1, b1, w2, b2, w3, b3 = params
    latent = jnp.take_along_axis(support, upsample_indices, axis=1)   # (B, N, C_in)
    h = _leaky(latent @ w1 + b1)
    h = _leaky(h @ w2 + b2)
    h = h + query
    return _leaky(h @ w3 + b3)


if __name__ == "__main__":
    B, N, M = 2, 64, 24
    C_IN, C_OUT = 16, 32   # in_channels (support feats), out_channels (query feats)

    key = jax.random.PRNGKey(0)
    kq, ks, ki, k1, k2, k3, k4, k5, k6 = jax.random.split(key, 9)

    query = jax.random.normal(kq, (B, N, C_OUT), dtype=jnp.float32)
    support = jax.random.normal(ks, (B, M, C_IN), dtype=jnp.float32)
    upsample_indices = jax.random.randint(ki, (B, N, 1), 0, M, dtype=jnp.int32)

    # Deterministic parameter init (UnaryBlock x3, norm folded into Linear).
    s1 = 1.0 / jnp.sqrt(jnp.float32(C_IN))
    s2 = 1.0 / jnp.sqrt(jnp.float32(C_OUT))
    w1 = jax.random.uniform(k1, (C_IN, C_OUT), jnp.float32, -s1, s1)
    b1 = jax.random.uniform(k2, (1, C_OUT), jnp.float32, -s1, s1)
    w2 = jax.random.uniform(k3, (C_OUT, C_OUT), jnp.float32, -s2, s2)
    b2 = jax.random.uniform(k4, (1, C_OUT), jnp.float32, -s2, s2)
    w3 = jax.random.uniform(k5, (C_OUT, C_OUT), jnp.float32, -s2, s2)
    b3 = jax.random.uniform(k6, (1, C_OUT), jnp.float32, -s2, s2)
    params = (w1, b1, w2, b2, w3, b3)

    out = upsampling_forward(query, support, upsample_indices, params)
    out = jax.block_until_ready(out)
    assert out.shape == (B, N, C_OUT)

    # Only deviation from the pure-f32 reference is the bf16 cast of the
    # hoisted support activations on the kernel path.
    ref = _reference(query, support, upsample_indices, params)
    assert jnp.allclose(out, ref, atol=3e-2, rtol=3e-2), "mismatch vs JAX reference"

    print("KERNEL_OK")
</pallas_src>

<mosaic_0001>
module attributes {stable_mosaic.version = 11 : i64} {
  func.func @_upsampling_kernel(%arg0: i32, %arg1: i32, %arg2: memref<1x64x1xi32, #tpu.memory_space<vmem>>, %arg3: memref<1x32x32xbf16, #tpu.memory_space<vmem>>, %arg4: memref<1x64x32xf32, #tpu.memory_space<vmem>>, %arg5: memref<32x32xf32, #tpu.memory_space<vmem>>, %arg6: memref<1x32xf32, #tpu.memory_space<vmem>>, %arg7: memref<1x64x32xf32, #tpu.memory_space<vmem>>) attributes {dimension_semantics = [#tpu.dimension_semantics<parallel>, #tpu.dimension_semantics<parallel>], iteration_bounds = array<i64: 2, 1>, scalar_prefetch = 0 : i64, scratch_operands = 0 : i64, tpu.core_type = #tpu.core_type<tc>, window_params = [{transform_indices = @transform_0, window_bounds = array<i64: 1, 64, 1>}, {transform_indices = @transform_1, window_bounds = array<i64: 1, 32, 32>}, {transform_indices = @transform_2, window_bounds = array<i64: 1, 64, 32>}, {pipeline_mode = #tpu.pipeline_mode<synchronous>, transform_indices = @transform_3, window_bounds = array<i64: 32, 32>}, {pipeline_mode = #tpu.pipeline_mode<synchronous>, transform_indices = @transform_4, window_bounds = array<i64: 1, 32>}, {transform_indices = @transform_5, window_bounds = array<i64: 1, 64, 32>}]} {
    %c0 = arith.constant 0 : index
    %c0_0 = arith.constant 0 : index
    %c0_1 = arith.constant 0 : index
    %0 = vector.load %arg2[%c0, %c0_0, %c0_1] : memref<1x64x1xi32, #tpu.memory_space<vmem>>, vector<1x64x1xi32>
    %1 = vector.shape_cast %0 : vector<1x64x1xi32> to vector<64x1xi32>
    %2 = tpu.iota {dimensions = array<i32: 1>} : vector<64x32xi32>
    %c0_i32 = arith.constant 0 : i32
    %3 = vector.broadcast %c0_i32 : i32 to vector<64x32xi32>
    %4 = arith.addi %2, %3 : vector<64x32xi32>
    %5 = vector.broadcast %1 : vector<64x1xi32> to vector<64x32xi32>
    %6 = arith.cmpi eq, %4, %5 : vector<64x32xi32>
    %7 = arith.extui %6 : vector<64x32xi1> to vector<64x32xi32>
    %8 = arith.sitofp %7 : vector<64x32xi32> to vector<64x32xf32>
    %9 = arith.truncf %8 : vector<64x32xf32> to vector<64x32xbf16>
    %c0_2 = arith.constant 0 : index
    %c0_3 = arith.constant 0 : index
    %c0_4 = arith.constant 0 : index
    %10 = vector.load %arg3[%c0_2, %c0_3, %c0_4] : memref<1x32x32xbf16, #tpu.memory_space<vmem>>, vector<1x32x32xbf16>
    %11 = vector.shape_cast %10 : vector<1x32x32xbf16> to vector<32x32xbf16>
    %cst = arith.constant dense<0.000000e+00> : vector<64x32xf32>
    %12 = tpu.matmul %9, %11, %cst {dimension_numbers = #tpu.dot_dimension_numbers<[1], [0], [0], [1], [0, 0, 1, 1], [], []>} : vector<64x32xbf16>, vector<32x32xbf16>, vector<64x32xf32> -> vector<64x32xf32>
    %c0_5 = arith.constant 0 : index
    %c0_6 = arith.constant 0 : index
    %c0_7 = arith.constant 0 : index
    %13 = vector.load %arg4[%c0_5, %c0_6, %c0_7] : memref<1x64x32xf32, #tpu.memory_space<vmem>>, vector<1x64x32xf32>
    %14 = vector.shape_cast %13 : vector<1x64x32xf32> to vector<64x32xf32>
    %15 = arith.addf %12, %14 : vector<64x32xf32>
    %c0_8 = arith.constant 0 : index
    %c0_9 = arith.constant 0 : index
    %16 = vector.load %arg5[%c0_8, %c0_9] : memref<32x32xf32, #tpu.memory_space<vmem>>, vector<32x32xf32>
    %cst_10 = arith.constant dense<0.000000e+00> : vector<64x32xf32>
    %17 = tpu.matmul %15, %16, %cst_10 {dimension_numbers = #tpu.dot_dimension_numbers<[1], [0], [0], [1], [0, 0, 1, 1], [], []>} : vector<64x32xf32>, vector<32x32xf32>, vector<64x32xf32> -> vector<64x32xf32>
    %c0_11 = arith.constant 0 : index
    %c0_12 = arith.constant 0 : index
    %18 = vector.load %arg6[%c0_11, %c0_12] : memref<1x32xf32, #tpu.memory_space<vmem>>, vector<1x32xf32>
    %19 = vector.broadcast %18 : vector<1x32xf32> to vector<64x32xf32>
    %20 = arith.addf %17, %19 : vector<64x32xf32>
    %cst_13 = arith.constant 0.000000e+00 : f32
    %21 = vector.broadcast %cst_13 : f32 to vector<64x32xf32>
    %22 = arith.cmpf ogt, %20, %21 : vector<64x32xf32>
    %cst_14 = arith.constant 1.000000e-01 : f32
    %23 = vector.broadcast %cst_14 : f32 to vector<64x32xf32>
    %24 = arith.mulf %23, %20 : vector<64x32xf32>
    %25 = arith.select %22, %20, %24 : vector<64x32xi1>, vector<64x32xf32>
    %c0_15 = arith.constant 0 : index
    %c0_16 = arith.constant 0 : index
    %c0_17 = arith.constant 0 : index
    %26 = vector.load %arg7[%c0_15, %c0_16, %c0_17] : memref<1x64x32xf32, #tpu.memory_space<vmem>>, vector<1x64x32xf32>
    %27 = vector.shape_cast %26 : vector<1x64x32xf32> to vector<64x32xf32>
    %28 = vector.shape_cast %25 : vector<64x32xf32> to vector<1x64x32xf32>
    tpu.vector_store %arg7[%c0_15, %c0_16, %c0_17], %28 {strides = array<i32>} : memref<1x64x32xf32, #tpu.memory_space<vmem>>, vector<1x64x32xf32>,
    return
  }
  func.func @transform_0(%arg0: i32, %arg1: i32) -> (i32, i32, i32) {
    %c0_i32 = arith.constant 0 : i32
    %c0_i32_0 = arith.constant 0 : i32
    return %arg0, %arg1, %c0_i32 : i32, i32, i32
  }
  func.func @transform_1(%arg0: i32, %arg1: i32) -> (i32, i32, i32) {
    %c0_i32 = arith.constant 0 : i32
    %c0_i32_0 = arith.constant 0 : i32
    %c0_i32_1 = arith.constant 0 : i32
    return %arg0, %c0_i32, %c0_i32_0 : i32, i32, i32
  }
  func.func @transform_2(%arg0: i32, %arg1: i32) -> (i32, i32, i32) {
    %c0_i32 = arith.constant 0 : i32
    %c0_i32_0 = arith.constant 0 : i32
    return %arg0, %arg1, %c0_i32 : i32, i32, i32
  }
  func.func @transform_3(%arg0: i32, %arg1: i32) -> (i32, i32) {
    %c0_i32 = arith.constant 0 : i32
    %c0_i32_0 = arith.constant 0 : i32
    %c0_i32_1 = arith.constant 0 : i32
    return %c0_i32, %c0_i32_0 : i32, i32
  }
  func.func @transform_4(%arg0: i32, %arg1: i32) -> (i32, i32) {
    %c0_i32 = arith.constant 0 : i32
    %c0_i32_0 = arith.constant 0 : i32
    %c0_i32_1 = arith.constant 0 : i32
    return %c0_i32, %c0_i32_0 : i32, i32
  }
  func.func @transform_5(%arg0: i32, %arg1: i32) -> (i32, i32, i32) {
    %c0_i32 = arith.constant 0 : i32
    %c0_i32_0 = arith.constant 0 : i32
    return %arg0, %arg1, %c0_i32 : i32, i32, i32
  }
}

</mosaic_0001>

<llo_original>
// kernel: upsampling_forward.1
$region0: #{upsampling_forward.1}
  #allocation0 [shape = 'u32[]', space=smem, size = 0x4, offset = 0x4, fixed_abs, tag = 'smem constant byte address 0x4 - core index']
  #allocation1 [shape = 'u32[144,128]{1,0:T(1,128)}', space=vmem, size = 0x12000, scoped, tag = 'internal scratch']
  %s0 = inlined_call_operand.vmem [shape: s32[2,64,1], index: 0, kind: input, shape index: {}]
  %s1 = inlined_call_operand.vmem [shape: bf16[2,32,32], index: 1, kind: input, shape index: {}]
  %s2 = inlined_call_operand.vmem [shape: f32[2,64,32], index: 2, kind: input, shape index: {}]
  %s3 = inlined_call_operand.vmem [shape: f32[32,32], index: 3, kind: input, shape index: {}]
  %s4 = inlined_call_operand.vmem [shape: f32[1,32], index: 4, kind: input, shape index: {}]
  %s5 = inlined_call_operand.vmem [shape: f32[2,64,32], index: 5, kind: output, shape index: {}]
  %s6 = sld [smem:[#allocation0]]
  $region53: #{upsampling_forward.1} parent=0
    _
  %s8 = ssub.s32 1, %s6
  %s9 = scalar_select 0, %s8, %s6
  loop: start=0, step=1, limit=4
  $region2: #{upsampling_forward.1} parent=0 // loop_pre_header
    _
  $region3: #{upsampling_forward.1} parent=0 // loop_header
    %s11 = sphi 0, %s15
    %p12 = scmp.ge.s32.totalorder %s11, 4
    %s18 = sphi 0, %s30
    %s19 = sphi 0, %s26
    %s20 = sphi 0, %s18
    %s21 = sphi 0, %s19
    %s22 = sphi 0, %s20
    %s23 = sphi 0, %s21
    %s35 = sphi 0, %s37
    %s38 = sphi 0, %s35
    %s39 = sphi 0, %s38
    %s55 = sphi 0, %s39
    %s61 = sphi 0, %s63
    %s64 = sphi 0, %s61
    %s65 = sphi 0, %s64
    %s81 = sphi 0, %s65
    %s89 = sphi 0, %s91
    %s92 = sphi 0, %s89
    %s93 = sphi 0, %s92
    %s109 = sphi 0, %s93
    %s113 = sphi 0, %s113
    %s115 = sphi 0, %s113
    %s116 = sphi 0, %s115
    %s130 = sphi 0, %s116
    %s134 = sphi 0, %s134
    %s136 = sphi 0, %s134
    %s137 = sphi 0, %s136
    %s151 = sphi 0, %s137
    %s159 = sphi 0, %s161
    %s162 = sphi 0, %s159
    %s163 = sphi 0, %s162
    %s179 = sphi 0, %s163
  $region4: #{upsampling_forward.1} parent=0 // loop_header_branch
    %14 = sbr.rel (%p12) target = $region8
  $region5: #{upsampling_forward.1} parent=0 // loop_body
    %s16 = ssub.s32 %s11, 1
    %s17 = ssub.s32 %s11, 2
    %s24 = sadd.s32 1, %s19
    %p25 = scmp.ge.s32.totalorder %s24, 1
    %s26 = scalar_select %p25, 0, %s24
    %s27 = sadd.s32 1, %s18
    %s28 = scalar_select %p25, %s27, %s18
    %p29 = scmp.ge.s32.totalorder %s28, 2
    %s30 = scalar_select %p29, 0, %s28
    %s31 = ssub.s32 %s18, %s30
    %s32 = ssub.s32 %s19, %s26
    %s33 = sor.u32 %s31, %s32
    %p34 = scmp.eq.s32.totalorder %s33, 0
    %s36 = sadd.s32 %s35, 1
    %s37 = scalar_select %p34, %s35, %s36
    %p40 = pneg %p34
    %p41 = scmp.eq.s32.totalorder %s11, 1
    %p42 = por %p40, %p41
    %p43 = scmp.ne.s32.totalorder %s35, %s38
    %p44 = scmp.eq.s32.totalorder %s11, 0
    %p45 = por %p43, %p44
    %p46 = scmp.ne.s32.totalorder %s35, %s38
    %p47 = scmp.eq.s32.totalorder %s16, 1
    %p48 = por %p46, %p47
    %p49 = scmp.ne.s32.totalorder %s38, %s39
    %p50 = scmp.eq.s32.totalorder %s16, 0
    %p51 = por %p49, %p50
    %p52 = scmp.ne.s32.totalorder %s38, %s39
    %p53 = scmp.eq.s32.totalorder %s17, 1
    %p54 = por %p52, %p53
    %p56 = scmp.ne.s32.totalorder %s39, %s55
    %p57 = scmp.eq.s32.totalorder %s17, 0
    %p58 = por %p56, %p57
    %s59 = ssub.s32 %s18, %s30
    %p60 = scmp.eq.s32.totalorder %s59, 0
    %s62 = sadd.s32 %s61, 1
    %s63 = scalar_select %p60, %s61, %s62
    %p66 = pneg %p60
    %p67 = scmp.eq.s32.totalorder %s11, 1
    %p68 = por %p66, %p67
    %p69 = scmp.ne.s32.totalorder %s61, %s64
    %p70 = scmp.eq.s32.totalorder %s11, 0
    %p71 = por %p69, %p70
    %p72 = scmp.ne.s32.totalorder %s61, %s64
    %p73 = scmp.eq.s32.totalorder %s16, 1
    %p74 = por %p72, %p73
    %p75 = scmp.ne.s32.totalorder %s64, %s65
    %p76 = scmp.eq.s32.totalorder %s16, 0
    %p77 = por %p75, %p76
    %p78 = scmp.ne.s32.totalorder %s64, %s65
    %p79 = scmp.eq.s32.totalorder %s17, 1
    %p80 = por %p78, %p79
    %p82 = scmp.ne.s32.totalorder %s65, %s81
    %p83 = scmp.eq.s32.totalorder %s17, 0
    %p84 = por %p82, %p83
    %s85 = ssub.s32 %s18, %s30
    %s86 = ssub.s32 %s19, %s26
    %s87 = sor.u32 %s85, %s86
    %p88 = scmp.eq.s32.totalorder %s87, 0
    %s90 = sadd.s32 %s89, 1
    %s91 = scalar_select %p88, %s89, %s90
    %p94 = pneg %p88
    %p95 = scmp.eq.s32.totalorder %s11, 1
    %p96 = por %p94, %p95
    %p97 = scmp.ne.s32.totalorder %s89, %s92
    %p98 = scmp.eq.s32.totalorder %s11, 0
    %p99 = por %p97, %p98
    %p100 = scmp.ne.s32.totalorder %s89, %s92
    %p101 = scmp.eq.s32.totalorder %s16, 1
    %p102 = por %p100, %p101
    %p103 = scmp.ne.s32.totalorder %s92, %s93
    %p104 = scmp.eq.s32.totalorder %s16, 0
    %p105 = por %p103, %p104
    %p106 = scmp.ne.s32.totalorder %s92, %s93
    %p107 = scmp.eq.s32.totalorder %s17, 1
    %p108 = por %p106, %p107
    %p110 = scmp.ne.s32.totalorder %s93, %s109
    %p111 = scmp.eq.s32.totalorder %s17, 0
    %p112 = por %p110, %p111
    %s114 = sadd.s32 %s113, 1
    %p117 = scmp.eq.s32.totalorder %s11, 1
    %p118 = scmp.ne.s32.totalorder %s113, %s115
    %p119 = scmp.eq.s32.totalorder %s11, 0
    %p120 = por %p118, %p119
    %p121 = scmp.ne.s32.totalorder %s113, %s115
    %p122 = scmp.eq.s32.totalorder %s16, 1
    %p123 = por %p121, %p122
    %p124 = scmp.ne.s32.totalorder %s115, %s116
    %p125 = scmp.eq.s32.totalorder %s16, 0
    %p126 = por %p124, %p125
    %p127 = scmp.ne.s32.totalorder %s115, %s116
    %p128 = scmp.eq.s32.totalorder %s17, 1
    %p129 = por %p127, %p128
    %p131 = scmp.ne.s32.totalorder %s116, %s130
    %p132 = scmp.eq.s32.totalorder %s17, 0
    %p133 = por %p131, %p132
    %s135 = sadd.s32 %s134, 1
    %p138 = scmp.eq.s32.totalorder %s11, 1
    %p139 = scmp.ne.s32.totalorder %s134, %s136
    %p140 = scmp.eq.s32.totalorder %s11, 0
    %p141 = por %p139, %p140
    %p142 = scmp.ne.s32.totalorder %s134, %s136
    %p143 = scmp.eq.s32.totalorder %s16, 1
    %p144 = por %p142, %p143
    %p145 = scmp.ne.s32.totalorder %s136, %s137
    %p146 = scmp.eq.s32.totalorder %s16, 0
    %p147 = por %p145, %p146
    %p148 = scmp.ne.s32.totalorder %s136, %s137
    %p149 = scmp.eq.s32.totalorder %s17, 1
    %p150 = por %p148, %p149
    %p152 = scmp.ne.s32.totalorder %s137, %s151
    %p153 = scmp.eq.s32.totalorder %s17, 0
    %p154 = por %p152, %p153
    %s155 = ssub.s32 %s18, %s30
    %s156 = ssub.s32 %s19, %s26
    %s157 = sor.u32 %s155, %s156
    %p158 = scmp.eq.s32.totalorder %s157, 0
    %s160 = sadd.s32 %s159, 1
    %s161 = scalar_select %p158, %s159, %s160
    %p164 = pneg %p158
    %p165 = scmp.eq.s32.totalorder %s11, 1
    %p166 = por %p164, %p165
    %p167 = scmp.ne.s32.totalorder %s159, %s162
    %p168 = scmp.eq.s32.totalorder %s11, 0
    %p169 = por %p167, %p168
    %p170 = scmp.ne.s32.totalorder %s159, %s162
    %p171 = scmp.eq.s32.totalorder %s16, 1
    %p172 = por %p170, %p171
    %p173 = scmp.ne.s32.totalorder %s162, %s163
    %p174 = scmp.eq.s32.totalorder %s16, 0
    %p175 = por %p173, %p174
    %p176 = scmp.ne.s32.totalorder %s162, %s163
    %p177 = scmp.eq.s32.totalorder %s17, 1
    %p178 = por %p176, %p177
    %p180 = scmp.ne.s32.totalorder %s163, %s179
    %p181 = scmp.eq.s32.totalorder %s17, 0
    %p182 = por %p180, %p181
    %p183 = scmp.le.s32.totalorder 1, %s11
    %p184 = scmp.lt.s32.totalorder %s11, 3
    %p185 = pnand %p183, %p184
    %p186 = pneg %p185
    // Predicated region
    $region9: #{upsampling_forward.1} parent=5 // pred_check
      _
    $region10: #{upsampling_forward.1} parent=5 // pred_check_branch
      %188 = sbr.rel (%p185) target = $region12
    $region11: #{upsampling_forward.1} parent=5 // pred_region
      %s189 = ssub.s32 %s11, 1
      // Predicated region
      $region13: #{upsampling_forward.1} parent=11 // pred_check
        %p190 = pneg %p126
      $region14: #{upsampling_forward.1} parent=11 // pred_check_branch
        %192 = sbr.rel (%p190) target = $region16
      $region15: #{upsampling_forward.1} parent=11 // pred_region
        _
      $region16: #{upsampling_forward.1} parent=11 // pred_fallthru
        _
      // Predicated region
      $region17: #{upsampling_forward.1} parent=11 // pred_check
        %p193 = pneg %p147
      $region18: #{upsampling_forward.1} parent=11 // pred_check_branch
        %195 = sbr.rel (%p193) target = $region20
      $region19: #{upsampling_forward.1} parent=11 // pred_region
        _
      $region20: #{upsampling_forward.1} parent=11 // pred_fallthru
        _
    $region12: #{upsampling_forward.1} parent=5 // pred_fallthru
      _
    %p196 = scmp.lt.s32.totalorder %s11, 2
    // Predicated region
    $region21: #{upsampling_forward.1} parent=5 // pred_check
      %p197 = pneg %p196
    $region22: #{upsampling_forward.1} parent=5 // pred_check_branch
      %199 = sbr.rel (%p197) target = $region24
    $region23: #{upsampling_forward.1} parent=5 // pred_region
      // Predicated region
      $region25: #{upsampling_forward.1} parent=23 // pred_check
        %p200 = pneg %p45
      $region26: #{upsampling_forward.1} parent=23 // pred_check_branch
        %202 = sbr.rel (%p200) target = $region28
      $region27: #{upsampling_forward.1} parent=23 // pred_region
        %s203 = smul.u32 8, %s19
        %p204 = scmp.lt.s32.totalorder %s18, 1
        %s205 = scalar_select %p204, %s18, 1
        %p206 = scmp.lt.s32.totalorder %s203, 7
        %s207 = scalar_select %p206, %s203, 7
        %s208 = smul.addr %s205, 8
        %s209 = sadd.s32 %s207, %s208
        %s210 = smul.addr %s209, 8
        %s211 = scalar_lea.vmem %s0, %s210
        %s212 = smul.u32 8, %s19
      $region28: #{upsampling_forward.1} parent=23 // pred_fallthru
        _
      // Predicated region
      $region29: #{upsampling_forward.1} parent=23 // pred_check
        %p213 = pneg %p71
      $region30: #{upsampling_forward.1} parent=23 // pred_check_branch
        %215 = sbr.rel (%p213) target = $region32
      $region31: #{upsampling_forward.1} parent=23 // pred_region
        %p216 = scmp.lt.s32.totalorder %s18, 1
        %s217 = scalar_select %p216, %s18, 1
        %s218 = smul.addr %s217, 4
        %s219 = smul.addr %s218, 4
        %s220 = scalar_lea.vmem %s1, %s219
      $region32: #{upsampling_forward.1} parent=23 // pred_fallthru
        _
      // Predicated region
      $region33: #{upsampling_forward.1} parent=23 // pred_check
        %p221 = pneg %p99
      $region34: #{upsampling_forward.1} parent=23 // pred_check_branch
        %223 = sbr.rel (%p221) target = $region36
      $region35: #{upsampling_forward.1} parent=23 // pred_region
        %s224 = smul.u32 8, %s19
        %p225 = scmp.lt.s32.totalorder %s18, 1
        %s226 = scalar_select %p225, %s18, 1
        %p227 = scmp.lt.s32.totalorder %s224, 7
        %s228 = scalar_select %p227, %s224, 7
        %s229 = smul.addr %s226, 8
        %s230 = sadd.s32 %s228, %s229
        %s231 = smul.addr %s230, 8
        %s232 = scalar_lea.vmem %s2, %s231
        %s233 = smul.u32 8, %s19
      $region36: #{upsampling_forward.1} parent=23 // pred_fallthru
        _
    $region24: #{upsampling_forward.1} parent=5 // pred_fallthru
      _
    %p234 = scmp.le.s32.totalorder 1, %s11
    %p235 = scmp.lt.s32.totalorder %s11, 3
    %p236 = pnand %p234, %p235
    %p237 = pneg %p236
    // Predicated region
    $region37: #{upsampling_forward.1} parent=5 // pred_check
      _
    $region38: #{upsampling_forward.1} parent=5 // pred_check_branch
      %239 = sbr.rel (%p236) target = $region40
    $region39: #{upsampling_forward.1} parent=5 // pred_region
      %s240 = ssub.s32 %s11, 1
      %s241 = smul.u32 8, %s21
      %p242 = scmp.lt.s32.totalorder %s20, 1
      %s243 = scalar_select %p242, %s20, 1
      %p244 = scmp.lt.s32.totalorder %s241, 7
      %s245 = scalar_select %p244, %s241, 7
      %s246 = smul.addr %s243, 8
      %s247 = sadd.s32 %s245, %s246
      %s248 = smul.addr %s247, 8
      %s249 = scalar_lea.vmem %s0, %s248
      %p250 = pneg %p51
      %p251 = pneg %p48
      %p252 = scmp.lt.s32.totalorder %s20, 1
      %s253 = scalar_select %p252, %s20, 1
      %s254 = smul.addr %s253, 4
      %s255 = smul.addr %s254, 4
      %s256 = scalar_lea.vmem %s1, %s255
      %p257 = pneg %p77
      %p258 = pneg %p74
      %s259 = smul.u32 8, %s21
      %p260 = scmp.lt.s32.totalorder %s20, 1
      %s261 = scalar_select %p260, %s20, 1
      %p262 = scmp.lt.s32.totalorder %s259, 7
      %s263 = scalar_select %p262, %s259, 7
      %s264 = smul.addr %s261, 8
      %s265 = sadd.s32 %s263, %s264
      %s266 = smul.addr %s265, 8
      %s267 = scalar_lea.vmem %s2, %s266
      %p268 = pneg %p105
      %p269 = pneg %p102
      %p270 = pneg %p126
      %p271 = pneg %p123
      %p272 = pneg %p147
      %p273 = pneg %p144
      %p274 = pneg %p175
      %p275 = pneg %p172
      %s276 = smul.u32 8, %s21
      %p277 = scmp.lt.s32.totalorder %s20, 1
      %s278 = scalar_select %p277, %s20, 1
      %p279 = scmp.lt.s32.totalorder %s276, 7
      %s280 = scalar_select %p279, %s276, 7
      %s281 = smul.addr %s278, 8
      %s282 = sadd.s32 %s280, %s281
      %s283 = smul.addr %s282, 8
      %s284 = scalar_lea.vmem %s5, %s283
      %s285 = smul.u32 8, %s21
      %p286 = scmp.lt.s32.totalorder %s20, 1
      %s287 = scalar_select %p286, %s20, 1
      %p288 = scmp.lt.s32.totalorder %s285, 7
      %s289 = scalar_select %p288, %s285, 7
      %s290 = smul.addr %s287, 8
      %s291 = sadd.s32 %s289, %s290
      %s292 = smul.addr %s291, 8
      %s293 = scalar_lea.vmem %s0, %s292
      %s294 = smul.u32 8, %s21
      %p295 = scmp.lt.s32.totalorder %s20, 1
      %s296 = scalar_select %p295, %s20, 1
      %s297 = smul.addr %s296, 4
      %s298 = smul.addr %s297, 4
      %s299 = scalar_lea.vmem %s1, %s298
      %s300 = smul.u32 8, %s21
      %p301 = scmp.lt.s32.totalorder %s20, 1
      %s302 = scalar_select %p301, %s20, 1
      %p303 = scmp.lt.s32.totalorder %s300, 7
      %s304 = scalar_select %p303, %s300, 7
      %s305 = smul.addr %s302, 8
      %s306 = sadd.s32 %s304, %s305
      %s307 = smul.addr %s306, 8
      %s308 = scalar_lea.vmem %s2, %s307
      %s309 = smul.u32 8, %s21
      %s310 = smul.u32 8, %s21
      %p311 = scmp.lt.s32.totalorder %s20, 1
      %s312 = scalar_select %p311, %s20, 1
      %p313 = scmp.lt.s32.totalorder %s310, 7
      %s314 = scalar_select %p313, %s310, 7
      %s315 = smul.addr %s312, 8
      %s316 = sadd.s32 %s314, %s315
      %s317 = smul.addr %s316, 8
      %s318 = scalar_lea.vmem %s5, %s317
      %s319 = smul.u32 8, %s21
      %v321 = vld [vmem:[%s293] sm:$0xff]
      %v322 = vld [vmem:[%s293 + $0x8] sm:$0xff]
      %v323 = vld [vmem:[%s293 + $0x10] sm:$0xff]
      %v324 = vld [vmem:[%s293 + $0x18] sm:$0xff]
      %v325 = vld [vmem:[%s293 + $0x20] sm:$0xff]
      %v326 = vld [vmem:[%s293 + $0x28] sm:$0xff]
      %v327 = vld [vmem:[%s293 + $0x30] sm:$0xff]
      %v328 = vld [vmem:[%s293 + $0x38] sm:$0xff]
      %v329 = vlaneseq
      %v330 = vand.u32 %v329, 127
      %331 = vset.pattern.permute.xlu0 0
      %332 = vperm.xlu0 %331, %v321
      %v333 = vpop.permute.xlu0 %332
      %334 = vset.pattern.permute.xlu0 0
      %335 = vperm.xlu0 %334, %v322
      %v336 = vpop.permute.xlu0 %335
      %337 = vset.pattern.permute.xlu0 0
      %338 = vperm.xlu0 %337, %v323
      %v339 = vpop.permute.xlu0 %338
      %340 = vset.pattern.permute.xlu0 0
      %341 = vperm.xlu0 %340, %v324
      %v342 = vpop.permute.xlu0 %341
      %343 = vset.pattern.permute.xlu0 0
      %344 = vperm.xlu0 %343, %v325
      %v345 = vpop.permute.xlu0 %344
      %346 = vset.pattern.permute.xlu0 0
      %347 = vperm.xlu0 %346, %v326
      %v348 = vpop.permute.xlu0 %347
      %349 = vset.pattern.permute.xlu0 0
      %350 = vperm.xlu0 %349, %v327
      %v351 = vpop.permute.xlu0 %350
      %352 = vset.pattern.permute.xlu0 0
      %353 = vperm.xlu0 %352, %v328
      %v354 = vpop.permute.xlu0 %353
      %vm355 = vcmp.eq.s32.totalorder %v330, %v333
      %vm356 = vcmp.eq.s32.totalorder %v330, %v336
      %vm357 = vcmp.eq.s32.totalorder %v330, %v339
      %vm358 = vcmp.eq.s32.totalorder %v330, %v342
      %vm359 = vcmp.eq.s32.totalorder %v330, %v345
      %vm360 = vcmp.eq.s32.totalorder %v330, %v348
      %vm361 = vcmp.eq.s32.totalorder %v330, %v351
      %vm362 = vcmp.eq.s32.totalorder %v330, %v354
      %v363 = vsel %vm355, 1, 0
      %v364 = vsel %vm356, 1, 0
      %v365 = vsel %vm357, 1, 0
      %v366 = vsel %vm358, 1, 0
      %v367 = vsel %vm359, 1, 0
      %v368 = vsel %vm360, 1, 0
      %v369 = vsel %vm361, 1, 0
      %v370 = vsel %vm362, 1, 0
      %v371 = vcvt.s32.f32 %v363
      %v372 = vcvt.s32.f32 %v364
      %v373 = vcvt.s32.f32 %v365
      %v374 = vcvt.s32.f32 %v366
      %v375 = vcvt.s32.f32 %v367
      %v376 = vcvt.s32.f32 %v368
      %v377 = vcvt.s32.f32 %v369
      %v378 = vcvt.s32.f32 %v370
      %v379 = vpack.c.bf16 %v372, %v371
      %v380 = vpack.c.bf16 %v374, %v373
      %v381 = vpack.c.bf16 %v376, %v375
      %v382 = vpack.c.bf16 %v378, %v377
      %v383 = vld [vmem:[%s299] sm:$0xf]
      %v384 = vld [vmem:[%s299 + $0x4] sm:$0xf]
      %v385 = vld [vmem:[%s299 + $0x8] sm:$0xf]
      %v386 = vld [vmem:[%s299 + $0xc] sm:$0xf]
      %v387 = vld [vmem:[%s308] sm:$0xff]
      %v388 = vld [vmem:[%s308 + $0x8] sm:$0xff]
      %v389 = vld [vmem:[%s308 + $0x10] sm:$0xff]
      %v390 = vld [vmem:[%s308 + $0x18] sm:$0xff]
      %v391 = vld [vmem:[%s308 + $0x20] sm:$0xff]
      %v392 = vld [vmem:[%s308 + $0x28] sm:$0xff]
      %v393 = vld [vmem:[%s308 + $0x30] sm:$0xff]
      %v394 = vld [vmem:[%s308 + $0x38] sm:$0xff]
      %v399 = vunpack.c.l.b16 %v383
      %v400 = vunpack.c.l.b16 %v384
      %v401 = vunpack.c.l.b16 %v385
      %v402 = vunpack.c.l.b16 %v386
      %v403 = vpack.c.b16 %v400, %v399
      %v404 = vpack.c.b16 %v402, %v401
      %vm407 = vcmask 261120
      %v409 = vsel %vm407, %v379, 0
      %v412 = vsel %vm407, %v380, 0
      %v415 = vsel %vm407, %v381, 0
      %v418 = vsel %vm407, %v382, 0
      %420 = vmatprep.subr.bf16.mxu0 0
      %421 = vmatpush1.bf16.msra.mxu0 %v403
      %422 = vmatprep.subr.bf16.mxu0 0
      %423 = vmatpush1.bf16.msra.mxu0 %v404
      %424 = vmatprep.subr.bf16.mxu0 0
      %425 = vmatpush1.bf16.msra.mxu0 0
      %426 = vmatprep.subr.bf16.mxu0 0
      %427 = vmatpush1.bf16.msra.mxu0 0
      %428 = vmatprep.subr.bf16.mxu0 0
      %429 = vmatpush1.bf16.msra.mxu0 0
      %430 = vmatprep.subr.bf16.mxu0 0
      %431 = vmatpush1.bf16.msra.mxu0 0
      %432 = vmatprep.subr.bf16.mxu0 0
      %433 = vmatpush1.bf16.msra.mxu0 0
      %434 = vmatprep.subr.bf16.mxu0 0
      %435 = vmatpush1.bf16.msra.mxu0 0
      %436 = vmatprep.subr.bf16.mxu0 0
      %437 = vmatpush1.bf16.msra.mxu0 0
      %438 = vmatprep.subr.bf16.mxu0 0
      %439 = vmatpush1.bf16.msra.mxu0 0
      %440 = vmatprep.subr.bf16.mxu0 0
      %441 = vmatpush1.bf16.msra.mxu0 0
      %442 = vmatprep.subr.bf16.mxu0 0
      %443 = vmatpush1.bf16.msra.mxu0 0
      %444 = vmatprep.subr.bf16.mxu0 0
      %445 = vmatpush1.bf16.msra.mxu0 0
      %446 = vmatprep.subr.bf16.mxu0 0
      %447 = vmatpush1.bf16.msra.mxu0 0
      %448 = vmatprep.subr.bf16.mxu0 0
      %449 = vmatpush1.bf16.msra.mxu0 0
      %450 = vmatprep.subr.bf16.mxu0 0
      %451 = vmatpush1.bf16.msra.mxu0 0
      %452 = vmatprep.mubr.bf16.mxu0 0
      %453 = vmatmul.mubr.bf16.gmra.mrb[0].mxu0 %v409
      %v454 = vpop.f32.mrb[0].mxu0
      %v455 = vadd.f32 %v387, %v454
      %v456 = vpop.f32.mrb[0].mxu0
      %v457 = vpop.f32.mrb[0].mxu0
      %v458 = vadd.f32 %v388, %v457
      %v459 = vpop.f32.mrb[0].mxu0
      %460 = vmatprep.mubr.bf16.mxu0 0
      %461 = vmatmul.mubr.bf16.gmra.mrb[0].mxu0 %v412
      %v462 = vpop.f32.mrb[0].mxu0
      %v463 = vadd.f32 %v389, %v462
      %v464 = vpop.f32.mrb[0].mxu0
      %v465 = vpop.f32.mrb[0].mxu0
      %v466 = vadd.f32 %v390, %v465
      %v467 = vpop.f32.mrb[0].mxu0
      %468 = vmatprep.mubr.bf16.mxu0 0
      %469 = vmatmul.mubr.bf16.gmra.mrb[0].mxu0 %v415
      %v470 = vpop.f32.mrb[0].mxu0
      %v471 = vadd.f32 %v391, %v470
      %v472 = vpop.f32.mrb[0].mxu0
      %v473 = vpop.f32.mrb[0].mxu0
      %v474 = vadd.f32 %v392, %v473
      %v475 = vpop.f32.mrb[0].mxu0
      %476 = vmatprep.mubr.bf16.mxu0 0
      %477 = vmatmul.mubr.bf16.gmra.mrb[0].mxu0 %v418
      %v478 = vpop.f32.mrb[0].mxu0
      %v479 = vadd.f32 %v393, %v478
      %v480 = vpop.f32.mrb[0].mxu0
      %v481 = vpop.f32.mrb[0].mxu0
      %v482 = vadd.f32 %v394, %v481
      %v483 = vpop.f32.mrb[0].mxu0
      %484 = vdwg.mxu0
      %v485 = vld [vmem:[%s3] sm:$0xff]
      %v486 = vld [vmem:[%s3 + $0x8] sm:$0xff]
      %v487 = vld [vmem:[%s3 + $0x10] sm:$0xff]
      %v488 = vld [vmem:[%s3 + $0x18] sm:$0xff]
      %v489 = vld [vmem:[%s4] sm:$0x1]
      %v491 = vlaneseq
      %v492 = vshrl.u32 %v491, 7
      %v493 = vsub.s32 0, %v492
      %v494 = vrot.slane %v489, %v493
      %v497 = vsel %vm407, %v455, 0
      %v500 = vsel %vm407, %v458, 0
      %v503 = vsel %vm407, %v463, 0
      %v506 = vsel %vm407, %v466, 0
      %v509 = vsel %vm407, %v471, 0
      %v512 = vsel %vm407, %v474, 0
      %v515 = vsel %vm407, %v479, 0
      %v518 = vsel %vm407, %v482, 0
      %520 = vmatprep.subr.mxu0 0.0
      %521 = vmatpush1.msra.mxu0 %v485
      %522 = vmatprep.subr.mxu0 0.0
      %523 = vmatpush1.msra.mxu0 %v486
      %524 = vmatprep.subr.mxu0 0.0
      %525 = vmatpush1.msra.mxu0 %v487
      %526 = vmatprep.subr.mxu0 0.0
      %527 = vmatpush1.msra.mxu0 %v488
      %528 = vmatprep.subr.mxu0 0.0
      %529 = vmatpush1.msra.mxu0 0.0
      %530 = vmatprep.subr.mxu0 0.0
      %531 = vmatpush1.msra.mxu0 0.0
      %532 = vmatprep.subr.mxu0 0.0
      %533 = vmatpush1.msra.mxu0 0.0
      %534 = vmatprep.subr.mxu0 0.0
      %535 = vmatpush1.msra.mxu0 0.0
      %536 = vmatprep.subr.mxu0 0.0
      %537 = vmatpush1.msra.mxu0 0.0
      %538 = vmatprep.subr.mxu0 0.0
      %539 = vmatpush1.msra.mxu0 0.0
      %540 = vmatprep.subr.mxu0 0.0
      %541 = vmatpush1.msra.mxu0 0.0
      %542 = vmatprep.subr.mxu0 0.0
      %543 = vmatpush1.msra.mxu0 0.0
      %544 = vmatprep.subr.mxu0 0.0
      %545 = vmatpush1.msra.mxu0 0.0
      %546 = vmatprep.subr.mxu0 0.0
      %547 = vmatpush1.msra.mxu0 0.0
      %548 = vmatprep.subr.mxu0 0.0
      %549 = vmatpush1.msra.mxu0 0.0
      %550 = vmatprep.subr.mxu0 0.0
      %551 = vmatpush1.msra.mxu0 0.0
      %552 = vmatprep.subr.mxu0 0.0
      %553 = vmatpush1.msra.mxu0 0.0
      %554 = vmatprep.subr.mxu0 0.0
      %555 = vmatpush1.msra.mxu0 0.0
      %556 = vmatprep.subr.mxu0 0.0
      %557 = vmatpush1.msra.mxu0 0.0
      %558 = vmatprep.subr.mxu0 0.0
      %559 = vmatpush1.msra.mxu0 0.0
      %560 = vmatprep.subr.mxu0 0.0
      %561 = vmatpush1.msra.mxu0 0.0
      %562 = vmatprep.subr.mxu0 0.0
      %563 = vmatpush1.msra.mxu0 0.0
      %564 = vmatprep.subr.mxu0 0.0
      %565 = vmatpush1.msra.mxu0 0.0
      %566 = vmatprep.subr.mxu0 0.0
      %567 = vmatpush1.msra.mxu0 0.0
      %568 = vmatprep.subr.mxu0 0.0
      %569 = vmatpush1.msra.mxu0 0.0
      %570 = vmatprep.subr.mxu0 0.0
      %571 = vmatpush1.msra.mxu0 0.0
      %572 = vmatprep.subr.mxu0 0.0
      %573 = vmatpush1.msra.mxu0 0.0
      %574 = vmatprep.subr.mxu0 0.0
      %575 = vmatpush1.msra.mxu0 0.0
      %576 = vmatprep.subr.mxu0 0.0
      %577 = vmatpush1.msra.mxu0 0.0
      %578 = vmatprep.subr.mxu0 0.0
      %579 = vmatpush1.msra.mxu0 0.0
      %580 = vmatprep.subr.mxu0 0.0
      %581 = vmatpush1.msra.mxu0 0.0
      %582 = vmatprep.subr.mxu0 0.0
      %583 = vmatpush1.msra.mxu0 0.0
      %584 = vmatprep.mubr.f32.mxu0 0.0
      %585 = vmatmul.mubr.f32.gmra.mrb[0].mxu0 %v497
      %v586 = vpop.f32.mrb[0].mxu0
      %v587 = vadd.f32 %v494, %v586
      %v588 = vpop.f32.mrb[0].mxu0
      %589 = vmatprep.mubr.f32.mxu0 0.0
      %590 = vmatmul.mubr.f32.gmra.mrb[0].mxu0 %v500
      %v591 = vpop.f32.mrb[0].mxu0
      %v592 = vadd.f32 %v494, %v591
      %v593 = vpop.f32.mrb[0].mxu0
      %594 = vmatprep.mubr.f32.mxu0 0.0
      %595 = vmatmul.mubr.f32.gmra.mrb[0].mxu0 %v503
      %v596 = vpop.f32.mrb[0].mxu0
      %v597 = vadd.f32 %v494, %v596
      %v598 = vpop.f32.mrb[0].mxu0
      %599 = vmatprep.mubr.f32.mxu0 0.0
      %600 = vmatmul.mubr.f32.gmra.mrb[0].mxu0 %v506
      %v601 = vpop.f32.mrb[0].mxu0
      %v602 = vadd.f32 %v494, %v601
      %v603 = vpop.f32.mrb[0].mxu0
      %604 = vmatprep.mubr.f32.mxu0 0.0
      %605 = vmatmul.mubr.f32.gmra.mrb[0].mxu0 %v509
      %v606 = vpop.f32.mrb[0].mxu0
      %v607 = vadd.f32 %v494, %v606
      %v608 = vpop.f32.mrb[0].mxu0
      %609 = vmatprep.mubr.f32.mxu0 0.0
      %610 = vmatmul.mubr.f32.gmra.mrb[0].mxu0 %v512
      %v611 = vpop.f32.mrb[0].mxu0
      %v612 = vadd.f32 %v494, %v611
      %v613 = vpop.f32.mrb[0].mxu0
      %614 = vmatprep.mubr.f32.mxu0 0.0
      %615 = vmatmul.mubr.f32.gmra.mrb[0].mxu0 %v515
      %v616 = vpop.f32.mrb[0].mxu0
      %v617 = vadd.f32 %v494, %v616
      %v618 = vpop.f32.mrb[0].mxu0
      %619 = vmatprep.mubr.f32.mxu0 0.0
      %620 = vmatmul.mubr.f32.gmra.mrb[0].mxu0 %v518
      %v621 = vpop.f32.mrb[0].mxu0
      %v622 = vadd.f32 %v494, %v621
      %v623 = vpop.f32.mrb[0].mxu0
      %624 = vdwg.mxu0
      %vm625 = vcmp.gt.f32.partialorder %v587, 0.0
      %vm626 = vcmp.gt.f32.partialorder %v592, 0.0
      %vm627 = vcmp.gt.f32.partialorder %v597, 0.0
      %vm628 = vcmp.gt.f32.partialorder %v602, 0.0
      %vm629 = vcmp.gt.f32.partialorder %v607, 0.0
      %vm630 = vcmp.gt.f32.partialorder %v612, 0.0
      %vm631 = vcmp.gt.f32.partialorder %v617, 0.0
      %vm632 = vcmp.gt.f32.partialorder %v622, 0.0
      %v633 = vmul.f32 %v587, 0.1
      %v634 = vmul.f32 %v592, 0.1
      %v635 = vmul.f32 %v597, 0.1
      %v636 = vmul.f32 %v602, 0.1
      %v637 = vmul.f32 %v607, 0.1
      %v638 = vmul.f32 %v612, 0.1
      %v639 = vmul.f32 %v617, 0.1
      %v640 = vmul.f32 %v622, 0.1
      %v641 = vsel %vm625, %v587, %v633
      %v642 = vsel %vm626, %v592, %v634
      %v643 = vsel %vm627, %v597, %v635
      %v644 = vsel %vm628, %v602, %v636
      %v645 = vsel %vm629, %v607, %v637
      %v646 = vsel %vm630, %v612, %v638
      %v647 = vsel %vm631, %v617, %v639
      %v648 = vsel %vm632, %v622, %v640
      %649 = vst.msk [vmem:[%s318] sm:$0xff] %vm407, %v641
      %650 = vst.msk [vmem:[%s318 + $0x8] sm:$0xff] %vm407, %v642
      %651 = vst.msk [vmem:[%s318 + $0x10] sm:$0xff] %vm407, %v643
      %652 = vst.msk [vmem:[%s318 + $0x18] sm:$0xff] %vm407, %v644
      %653 = vst.msk [vmem:[%s318 + $0x20] sm:$0xff] %vm407, %v645
      %654 = vst.msk [vmem:[%s318 + $0x28] sm:$0xff] %vm407, %v646
      %655 = vst.msk [vmem:[%s318 + $0x30] sm:$0xff] %vm407, %v647
      %656 = vst.msk [vmem:[%s318 + $0x38] sm:$0xff] %vm407, %v648
      %s657 = smul.u32 8, %s21
      %p658 = scmp.lt.s32.totalorder %s20, 1
      %s659 = scalar_select %p658, %s20, 1
      %p660 = scmp.lt.s32.totalorder %s657, 7
      %s661 = scalar_select %p660, %s657, 7
      %s662 = smul.addr %s659, 8
      %s663 = sadd.s32 %s661, %s662
      %s664 = smul.addr %s663, 8
      %s665 = scalar_lea.vmem %s5, %s664
      // Predicated region
      $region41: #{upsampling_forward.1} parent=39 // pred_check
        %p666 = pneg %p172
      $region42: #{upsampling_forward.1} parent=39 // pred_check_branch
        %668 = sbr.rel (%p666) target = $region44
      $region43: #{upsampling_forward.1} parent=39 // pred_region
        %s669 = smul.u32 8, %s21
      $region44: #{upsampling_forward.1} parent=39 // pred_fallthru
        _
    $region40: #{upsampling_forward.1} parent=5 // pred_fallthru
      _
    %p670 = scmp.le.s32.totalorder 2, %s11
    // Predicated region
    $region45: #{upsampling_forward.1} parent=5 // pred_check
      %p671 = pneg %p670
    $region46: #{upsampling_forward.1} parent=5 // pred_check_branch
      %673 = sbr.rel (%p671) target = $region48
    $region47: #{upsampling_forward.1} parent=5 // pred_region
      %s674 = ssub.s32 %s11, 2
      // Predicated region
      $region49: #{upsampling_forward.1} parent=47 // pred_check
        %p675 = pneg %p178
      $region50: #{upsampling_forward.1} parent=47 // pred_check_branch
        %677 = sbr.rel (%p675) target = $region52
      $region51: #{upsampling_forward.1} parent=47 // pred_region
        %s678 = smul.u32 8, %s23
        %p679 = scmp.lt.s32.totalorder %s22, 1
        %s680 = scalar_select %p679, %s22, 1
        %p681 = scmp.lt.s32.totalorder %s678, 7
        %s682 = scalar_select %p681, %s678, 7
        %s683 = smul.addr %s680, 8
        %s684 = sadd.s32 %s682, %s683
        %s685 = smul.addr %s684, 8
        %s686 = scalar_lea.vmem %s5, %s685
      $region52: #{upsampling_forward.1} parent=47 // pred_fallthru
        _
    $region48: #{upsampling_forward.1} parent=5 // pred_fallthru
      _
  $region6: #{upsampling_forward.1} parent=0 // loop_footer
    %s15 = sadd.s32 1, %s11
  $region7: #{upsampling_forward.1} parent=0 // loop_footer_branch
    %10 = sbr.rel target = $region3
  $region8: #{upsampling_forward.1} parent=0 // loop_exit
    _

</llo_original>
